<compile_context>
chip_gen: v7x
topology: tpu7x:2x2x1
jax: 0.10.0
libtpu: 0.0.40
codegen_flags: <defaults>
</compile_context>

<pallas_src>
import functools
import math

import jax
import jax.numpy as jnp
from jax import lax
from jax.experimental import pallas as pl
from jax.experimental.pallas import tpu as pltpu


def _vmem_limit_bytes():
    """Generation-aware VMEM limit (v7x has only 64 MiB per TensorCore)."""
    cap = None
    try:
        info = pltpu.get_tpu_info()
        cap = getattr(info, "vmem_capacity_bytes", None)
    except Exception:
        cap = None
    if not cap:
        cap = 64 * 1024 * 1024  # conservative default (v7x-sized)
    return int(min(cap * 3 // 4, 100 * 1024 * 1024))


_VMEM_LIMIT = _vmem_limit_bytes()


# --------------------------------------------------------------------------- #
# Conv2d (stride 1, same padding) + bias + optional ReLU + optional fused
# 2x2/stride-2 max pool.  The KxK conv is unrolled into K*K (H*W, Cin)@(Cin,tC)
# MXU matmuls on a zero-padded VMEM scratch copy of the input.
# TODO(synk): at the real 512x512 resolution the early backbone layers need
# spatial (row-strip) tiling as well; at the demo size full-plane blocks fit.
# --------------------------------------------------------------------------- #
def _conv_kernel(x_ref, w_ref, b_ref, o_ref, xp_ref, *, K, pad, relu, pool):
    # x_ref : (1, H, W, Cin)    bf16 NHWC activations (unpadded)
    # w_ref : (K, K, Cin, tC)   bf16 HWIO weight tile (cout tile)
    # b_ref : (1, tC)           f32 bias tile
    # o_ref : (1, Ho, Wo, tC)   bf16 output tile (Ho = H//2 if pool else H)
    # xp_ref: (H+2p, W+2p, Cin) VMEM scratch: zero-padded input, filled once
    #                           per batch element (cout-tile index == 0).
    H, W, Cin = x_ref.shape[1], x_ref.shape[2], x_ref.shape[3]
    tC = o_ref.shape[3]

    @pl.when(pl.program_id(1) == 0)
    def _fill_padded_input():
        if pad > 0:
            xp_ref[...] = jnp.zeros_like(xp_ref)
        xp_ref[pad:pad + H, pad:pad + W, :] = x_ref[0]

    acc = jnp.zeros((H * W, tC), jnp.float32)
    # TODO(synk): fold taps (im2col pairs) to fill the 256-deep MXU contraction
    # on v6e/v7x; per-tap Cin-deep matmuls are kept for lowering simplicity.
    for dy in range(K):
        for dx in range(K):
            patch = xp_ref[dy:dy + H, dx:dx + W, :].reshape(H * W, Cin)
            acc = acc + jnp.dot(patch, w_ref[dy, dx],
                                preferred_element_type=jnp.float32)

    out = acc.reshape(H, W, tC) + b_ref[0]
    if relu:
        out = jnp.maximum(out, 0.0)
    if pool:
        out = jnp.max(out.reshape(H, W // 2, 2, tC), axis=2)
        out = jnp.max(out.reshape(H // 2, 2, W // 2, tC), axis=1)
    o_ref[0] = out.astype(o_ref.dtype)


@functools.lru_cache(maxsize=None)
def _make_conv(B, H, W, Cin, Cout, K, pad, relu, pool, tC):
    Hp, Wp = H + 2 * pad, W + 2 * pad
    Ho, Wo = (H // 2, W // 2) if pool else (H, W)
    n_ct = Cout // tC
    kernel = functools.partial(_conv_kernel, K=K, pad=pad, relu=relu, pool=pool)
    fn = pl.pallas_call(
        kernel,
        out_shape=jax.ShapeDtypeStruct((B, Ho, Wo, Cout), jnp.bfloat16),
        grid=(B, n_ct),
        in_specs=[
            pl.BlockSpec((1, H, W, Cin), lambda b, j: (b, 0, 0, 0)),
            pl.BlockSpec((K, K, Cin, tC), lambda b, j: (0, 0, 0, j)),
            pl.BlockSpec((1, tC), lambda b, j: (0, j)),
        ],
        out_specs=pl.BlockSpec((1, Ho, Wo, tC), lambda b, j: (b, 0, 0, j)),
        scratch_shapes=[pltpu.VMEM((Hp, Wp, Cin), jnp.bfloat16)],
        compiler_params=pltpu.CompilerParams(
            # Batch axis is sharded across TensorCores (megacore / v7x).  The
            # cout-tile axis stays "arbitrary" because the padded-input scratch
            # is filled once per batch element at tile index 0.
            dimension_semantics=("parallel", "arbitrary"),
            vmem_limit_bytes=_VMEM_LIMIT),
    )
    return jax.jit(fn)


def conv2d(x, w, b, *, K, pad, relu, pool=False):
    B, H, W, Cin = x.shape
    Cout = w.shape[-1]
    tC = 256 if Cout % 256 == 0 else Cout
    fn = _make_conv(B, H, W, Cin, Cout, K, pad, bool(relu), bool(pool), tC)
    return fn(x, w, b)


# --------------------------------------------------------------------------- #
# Fused 1x1 -> ReLU -> 1x1 head pair (conv5_4->conv5_5, Mconv6->Mconv7): the
# wide intermediate never leaves VMEM.
# --------------------------------------------------------------------------- #
def _conv1x1_pair_kernel(x_ref, w1_ref, b1_ref, w2_ref, b2_ref, o_ref):
    H, W, Cin = x_ref.shape[1], x_ref.shape[2], x_ref.shape[3]
    Cout = o_ref.shape[3]
    x = x_ref[0].reshape(H * W, Cin)
    h = jnp.dot(x, w1_ref[...], preferred_element_type=jnp.float32) + b1_ref[0]
    h = jnp.maximum(h, 0.0).astype(x_ref.dtype)
    o = jnp.dot(h, w2_ref[...], preferred_element_type=jnp.float32) + b2_ref[0]
    o_ref[0] = o.reshape(H, W, Cout).astype(o_ref.dtype)


@functools.lru_cache(maxsize=None)
def _make_conv1x1_pair(B, H, W, Cin, Cmid, Cout):
    fn = pl.pallas_call(
        _conv1x1_pair_kernel,
        out_shape=jax.ShapeDtypeStruct((B, H, W, Cout), jnp.bfloat16),
        grid=(B,),
        in_specs=[
            pl.BlockSpec((1, H, W, Cin), lambda b: (b, 0, 0, 0)),
            pl.BlockSpec((Cin, Cmid), lambda b: (0, 0)),
            pl.BlockSpec((1, Cmid), lambda b: (0, 0)),
            pl.BlockSpec((Cmid, Cout), lambda b: (0, 0)),
            pl.BlockSpec((1, Cout), lambda b: (0, 0)),
        ],
        out_specs=pl.BlockSpec((1, H, W, Cout), lambda b: (b, 0, 0, 0)),
        compiler_params=pltpu.CompilerParams(
            dimension_semantics=("parallel",),
            vmem_limit_bytes=_VMEM_LIMIT),
    )
    return jax.jit(fn)


def conv1x1_pair(x, w1, b1, w2, b2):
    B, H, W, Cin = x.shape
    Cmid, Cout = w1.shape[-1], w2.shape[-1]
    fn = _make_conv1x1_pair(B, H, W, Cin, Cmid, Cout)
    return fn(x, w1.reshape(Cin, Cmid), b1, w2.reshape(Cmid, Cout), b2)


# --------------------------------------------------------------------------- #
# Bilinear resize (PyTorch F.interpolate, align_corners=False), batched over
# channels per grid step:
#   horizontal pass as one (C*Hin, Win) @ (Win, Wout) matmul,
#   vertical pass as per-channel (Hout, Hin) @ (Hin, Wout) matmuls.
# --------------------------------------------------------------------------- #
def _resize_nchw_kernel(x_ref, rh_ref, rv_ref, o_ref):
    C, Hin, Win = x_ref.shape[1], x_ref.shape[2], x_ref.shape[3]
    Wout = rh_ref.shape[1]
    x = x_ref[0].astype(jnp.float32).reshape(C * Hin, Win)
    t = jnp.dot(x, rh_ref[...], preferred_element_type=jnp.float32)
    t = t.reshape(C, Hin, Wout)
    for c in range(C):
        o_ref[0, c] = jnp.dot(rv_ref[...], t[c],
                              preferred_element_type=jnp.float32
                              ).astype(o_ref.dtype)


@functools.lru_cache(maxsize=None)
def _make_resize_nchw(B, C, Hin, Win, Hout, Wout, out_dtype):
    fn = pl.pallas_call(
        _resize_nchw_kernel,
        out_shape=jax.ShapeDtypeStruct((B, C, Hout, Wout), out_dtype),
        grid=(B,),
        in_specs=[
            pl.BlockSpec((1, C, Hin, Win), lambda b: (b, 0, 0, 0)),
            pl.BlockSpec((Win, Wout), lambda b: (0, 0)),
            pl.BlockSpec((Hout, Hin), lambda b: (0, 0)),
        ],
        out_specs=pl.BlockSpec((1, C, Hout, Wout), lambda b: (b, 0, 0, 0)),
        compiler_params=pltpu.CompilerParams(
            dimension_semantics=("parallel",),
            vmem_limit_bytes=_VMEM_LIMIT),
    )
    return jax.jit(fn)


def _bilinear_weights(dst, src):
    # Interpolation matrix matching torch bilinear, align_corners=False.
    d = jnp.arange(dst, dtype=jnp.float32)
    s = (d + 0.5) * (src / dst) - 0.5
    s = jnp.maximum(s, 0.0)
    i0 = jnp.clip(jnp.floor(s).astype(jnp.int32), 0, src - 1)
    i1 = jnp.minimum(i0 + 1, src - 1)
    w1 = s - i0.astype(jnp.float32)
    w0 = 1.0 - w1
    m = jnp.zeros((dst, src), jnp.float32)
    rows = jnp.arange(dst)
    m = m.at[rows, i0].add(w0)
    m = m.at[rows, i1].add(w1)
    return m


# --------------------------------------------------------------------------- #
# Per-channel 2D argmax (strongest heatmap peak per keypoint part).
# TODO(synk): at 512x512 this should be strip-tiled over H with a running
# max/argmax accumulator (v7x VMEM); full-plane blocks are fine at demo size.
# --------------------------------------------------------------------------- #
def _argmax_kernel(h_ref, val_ref, idx_ref):
    x = h_ref[0]                                 # (H, W, C)
    H, W, C = x.shape
    m = jnp.max(x, axis=(0, 1))                  # (C,)
    row = lax.broadcasted_iota(jnp.int32, (H, W, C), 0)
    col = lax.broadcasted_iota(jnp.int32, (H, W, C), 1)
    flat = row * W + col
    idx = jnp.min(jnp.where(x >= m[None, None, :], flat, H * W), axis=(0, 1))
    val_ref[0, 0] = m
    idx_ref[0, 0] = idx.astype(jnp.int32)


@functools.lru_cache(maxsize=None)
def _make_argmax(B, H, W, C):
    fn = pl.pallas_call(
        _argmax_kernel,
        out_shape=(jax.ShapeDtypeStruct((B, 1, C), jnp.float32),
                   jax.ShapeDtypeStruct((B, 1, C), jnp.int32)),
        grid=(B,),
        in_specs=[pl.BlockSpec((1, H, W, C), lambda b: (b, 0, 0, 0))],
        out_specs=(pl.BlockSpec((1, 1, C), lambda b: (b, 0, 0)),
                   pl.BlockSpec((1, 1, C), lambda b: (b, 0, 0))),
        compiler_params=pltpu.CompilerParams(
            dimension_semantics=("parallel",),
            vmem_limit_bytes=_VMEM_LIMIT),
    )
    return jax.jit(fn)


# --------------------------------------------------------------------------- #
# bodypose_model architecture (controlnet_aux / CMU OpenPose body model)
# --------------------------------------------------------------------------- #
_VGG_CFG = [
    # (name, K, pad, cin, cout, relu, pool_after)
    ("conv1_1", 3, 1, 3, 64, True, False),
    ("conv1_2", 3, 1, 64, 64, True, True),
    ("conv2_1", 3, 1, 64, 128, True, False),
    ("conv2_2", 3, 1, 128, 128, True, True),
    ("conv3_1", 3, 1, 128, 256, True, False),
    ("conv3_2", 3, 1, 256, 256, True, False),
    ("conv3_3", 3, 1, 256, 256, True, False),
    ("conv3_4", 3, 1, 256, 256, True, True),
    ("conv4_1", 3, 1, 256, 512, True, False),
    ("conv4_2", 3, 1, 512, 512, True, False),
    ("conv4_3_CPM", 3, 1, 512, 256, True, False),
    ("conv4_4_CPM", 3, 1, 256, 128, True, False),
]


def _stage1_cfg(branch, cout):
    p = f"_CPM_L{branch}"
    return [
        (f"conv5_1{p}", 3, 1, 128, 128, True),
        (f"conv5_2{p}", 3, 1, 128, 128, True),
        (f"conv5_3{p}", 3, 1, 128, 128, True),
        (f"conv5_4{p}", 1, 0, 128, 512, True),
        (f"conv5_5{p}", 1, 0, 512, cout, False),
    ]


def _stageT_cfg(t, branch, cout):
    p = f"_stage{t}_L{branch}"
    cfg = [(f"Mconv1{p}", 7, 3, 185, 128, True)]
    for i in range(2, 6):
        cfg.append((f"Mconv{i}{p}", 7, 3, 128, 128, True))
    cfg.append((f"Mconv6{p}", 1, 0, 128, 128, True))
    cfg.append((f"Mconv7{p}", 1, 0, 128, cout, False))
    return cfg


class OpenPoseDetectorBatchedPallas:
    """Pallas/TPU re-implementation of OpenPoseDetectorBatched.forward.

    Returns a (B, 18, 2) array of normalized (x, y) body keypoints, [-1, -1]
    for parts below threshold — i.e. the `pose_results_to_keypoints_np` view
    of the "best pose" per image.
    """

    THRE1 = 0.1  # OpenPose body decoder heatmap-peak threshold

    def __init__(self, model_size=64, seed=42):
        # The real module resizes to 512x512; kept configurable for a demo.
        assert model_size % 8 == 0
        self.model_size = model_size

        all_layers = []
        self.vgg_layers = []
        for name, K, pad, cin, cout, relu, pool in _VGG_CFG:
            all_layers.append((name, K, pad, cin, cout, relu))
            self.vgg_layers.append((name, pool))

        self.branches = {}
        for branch, cout in ((1, 38), (2, 19)):
            cfg = _stage1_cfg(branch, cout)
            all_layers += cfg
            names = [c[0] for c in cfg]
            self.branches[(1, branch)] = (names[:-2], (names[-2], names[-1]))
        for t in range(2, 7):
            for branch, cout in ((1, 38), (2, 19)):
                cfg = _stageT_cfg(t, branch, cout)
                all_layers += cfg
                names = [c[0] for c in cfg]
                self.branches[(t, branch)] = (names[:-2], (names[-2], names[-1]))

        self.meta = {n: (K, pad, relu) for n, K, pad, _, _, relu in all_layers}

        # Deterministic synthetic weight init (HWIO, bf16), zero f32 biases.
        key = jax.random.PRNGKey(seed)
        self.params = {}
        for name, K, pad, cin, cout, relu in all_layers:
            key, sub = jax.random.split(key)
            w = jax.random.normal(sub, (K, K, cin, cout), jnp.float32)
            w = (w * (1.0 / math.sqrt(K * K * cin))).astype(jnp.bfloat16)
            b = jnp.zeros((1, cout), jnp.float32)
            self.params[name] = (w, b)

    def _run_branch(self, x, key):
        conv_names, (h1, h2) = self.branches[key]
        for name in conv_names:
            K, pad, relu = self.meta[name]
            w, b = self.params[name]
            x = conv2d(x, w, b, K=K, pad=pad, relu=relu, pool=False)
        w1, b1 = self.params[h1]
        w2, b2 = self.params[h2]
        return conv1x1_pair(x, w1, b1, w2, b2)

    def __call__(self, unnorm_images_rgb):
        return self.forward(unnorm_images_rgb)

    def forward(self, unnorm_images_rgb):
        # unnorm_images_rgb: (B, 3, H, W) float32, RGB in [0, 1] (NCHW)
        B, C, H, W = unnorm_images_rgb.shape
        if H != W:
            raise NotImplementedError("Only support square image")
        S = self.model_size

        # 1) bilinear resize (align_corners=False) to model resolution
        rv = _bilinear_weights(S, H)                 # (S, H)
        rh = _bilinear_weights(S, W).T               # (W, S)
        imgs = _make_resize_nchw(B, C, H, W, S, S, jnp.bfloat16)(
            unnorm_images_rgb.astype(jnp.float32), rh, rv)       # (B, 3, S, S)

        # 2) RGB -> BGR flip (torch .flip(1)) and NCHW -> NHWC (cheap glue)
        x = jnp.transpose(imgs[:, ::-1, :, :], (0, 2, 3, 1))
        x = x.astype(jnp.bfloat16)                                # (B, S, S, 3)

        # 3) VGG backbone; 2x2 max pools are fused into the preceding conv
        for name, pool in self.vgg_layers:
            K, pad, relu = self.meta[name]
            w, b = self.params[name]
            x = conv2d(x, w, b, K=K, pad=pad, relu=relu, pool=pool)
        feat = x                                                  # (B, S/8, S/8, 128)

        # 4) six two-branch refinement stages (fused 1x1 head pairs)
        paf = self._run_branch(feat, (1, 1))                      # 38 channels
        heat = self._run_branch(feat, (1, 2))                     # 19 channels
        for t in range(2, 7):
            inp = jnp.concatenate([paf, heat, feat], axis=-1)     # 185 channels
            paf = self._run_branch(inp, (t, 1))
            heat = self._run_branch(inp, (t, 2))

        # 5) upsample the 19 part heatmaps to model resolution, take the
        #    strongest peak per body part.
        hh = S // 8
        rv8 = _bilinear_weights(S, hh)
        rh8 = _bilinear_weights(S, hh).T
        heat_nchw = jnp.transpose(heat, (0, 3, 1, 2))             # (B, 19, hh, hh)
        heat_up = _make_resize_nchw(B, 19, hh, hh, S, S, jnp.float32)(
            heat_nchw, rh8, rv8)                                  # (B, 19, S, S)

        # TODO(synk): multi-scale averaging, gaussian_filter(sigma=3) smoothing
        # and the PAF line-integral greedy multi-person assembly
        # (candidates/subsets, format_body_result / make_pose_result /
        # select_best_pose) are data-dependent host-side loops with no clean
        # Pallas equivalent; we keep the strongest peak per body part
        # (single-person "best pose").
        heat_hwc = jnp.transpose(heat_up, (0, 2, 3, 1))           # (B, S, S, 19)
        vals, idxs = _make_argmax(B, S, S, 19)(heat_hwc)
        vals = vals[:, 0, :18]                                    # drop background
        idxs = idxs[:, 0, :18]
        ys = (idxs // S).astype(jnp.float32) / float(S)
        xs = (idxs % S).astype(jnp.float32) / float(S)
        kps = jnp.stack([xs, ys], axis=-1)                        # (B, 18, 2)
        valid = vals > self.THRE1
        return jnp.where(valid[..., None], kps, -1.0)


if __name__ == "__main__":
    key = jax.random.PRNGKey(0)
    B, Himg = 2, 32
    unnorm_images_rgb = jax.random.uniform(key, (B, 3, Himg, Himg), jnp.float32)

    detector = OpenPoseDetectorBatchedPallas(model_size=64, seed=42)
    kps = detector(unnorm_images_rgb)
    kps = jax.block_until_ready(kps)

    assert kps.shape == (B, 18, 2)
    assert bool(jnp.all(jnp.isfinite(kps)))
    print("KERNEL_OK")
</pallas_src>

<mosaic_0001>
module attributes {stable_mosaic.version = 11 : i64} {
  func.func @_resize_nchw_kernel(%arg0: i32, %arg1: memref<1x3x32x32xf32, #tpu.memory_space<vmem>>, %arg2: memref<32x64xf32, #tpu.memory_space<vmem>>, %arg3: memref<64x32xf32, #tpu.memory_space<vmem>>, %arg4: memref<1x3x64x64xbf16, #tpu.memory_space<vmem>>) attributes {dimension_semantics = [#tpu.dimension_semantics<parallel>], iteration_bounds = array<i64: 2>, scalar_prefetch = 0 : i64, scratch_operands = 0 : i64, tpu.core_type = #tpu.core_type<tc>, window_params = [{transform_indices = @transform_0, window_bounds = array<i64: 1, 3, 32, 32>}, {pipeline_mode = #tpu.pipeline_mode<synchronous>, transform_indices = @transform_1, window_bounds = array<i64: 32, 64>}, {pipeline_mode = #tpu.pipeline_mode<synchronous>, transform_indices = @transform_2, window_bounds = array<i64: 64, 32>}, {transform_indices = @transform_3, window_bounds = array<i64: 1, 3, 64, 64>}]} {
    %c0 = arith.constant 0 : index
    %c0_0 = arith.constant 0 : index
    %c0_1 = arith.constant 0 : index
    %c0_2 = arith.constant 0 : index
    %0 = vector.load %arg1[%c0, %c0_0, %c0_1, %c0_2] : memref<1x3x32x32xf32, #tpu.memory_space<vmem>>, vector<1x3x32x32xf32>
    %1 = vector.shape_cast %0 : vector<1x3x32x32xf32> to vector<3x32x32xf32>
    %2 = vector.shape_cast %1 : vector<3x32x32xf32> to vector<96x32xf32>
    %c0_3 = arith.constant 0 : index
    %c0_4 = arith.constant 0 : index
    %3 = vector.load %arg2[%c0_3, %c0_4] : memref<32x64xf32, #tpu.memory_space<vmem>>, vector<32x64xf32>
    %cst = arith.constant dense<0.000000e+00> : vector<96x64xf32>
    %4 = tpu.matmul %2, %3, %cst {dimension_numbers = #tpu.dot_dimension_numbers<[1], [0], [0], [1], [0, 0, 1, 1], [], []>} : vector<96x32xf32>, vector<32x64xf32>, vector<96x64xf32> -> vector<96x64xf32>
    %5 = vector.shape_cast %4 : vector<96x64xf32> to vector<3x32x64xf32>
    %c0_5 = arith.constant 0 : index
    %c0_6 = arith.constant 0 : index
    %6 = vector.load %arg3[%c0_5, %c0_6] : memref<64x32xf32, #tpu.memory_space<vmem>>, vector<64x32xf32>
    %7 = vector.extract_strided_slice %5 {offsets = [0, 0, 0], sizes = [1, 32, 64], strides = [1, 1, 1]} : vector<3x32x64xf32> to vector<1x32x64xf32>
    %8 = vector.shape_cast %7 : vector<1x32x64xf32> to vector<32x64xf32>
    %cst_7 = arith.constant dense<0.000000e+00> : vector<64x64xf32>
    %9 = tpu.matmul %6, %8, %cst_7 {dimension_numbers = #tpu.dot_dimension_numbers<[1], [0], [0], [1], [0, 0, 1, 1], [], []>} : vector<64x32xf32>, vector<32x64xf32>, vector<64x64xf32> -> vector<64x64xf32>
    %10 = arith.truncf %9 : vector<64x64xf32> to vector<64x64xbf16>
    %c0_8 = arith.constant 0 : index
    %c0_9 = arith.constant 0 : index
    %c0_10 = arith.constant 0 : index
    %c0_11 = arith.constant 0 : index
    %11 = vector.load %arg4[%c0_8, %c0_9, %c0_10, %c0_11] : memref<1x3x64x64xbf16, #tpu.memory_space<vmem>>, vector<1x1x64x64xbf16>
    %12 = vector.shape_cast %11 : vector<1x1x64x64xbf16> to vector<64x64xbf16>
    %13 = vector.shape_cast %10 : vector<64x64xbf16> to vector<1x1x64x64xbf16>
    tpu.vector_store %arg4[%c0_8, %c0_9, %c0_10, %c0_11], %13 {strides = array<i32>} : memref<1x3x64x64xbf16, #tpu.memory_space<vmem>>, vector<1x1x64x64xbf16>,
    %c0_12 = arith.constant 0 : index
    %c0_13 = arith.constant 0 : index
    %14 = vector.load %arg3[%c0_12, %c0_13] : memref<64x32xf32, #tpu.memory_space<vmem>>, vector<64x32xf32>
    %15 = vector.extract_strided_slice %5 {offsets = [1, 0, 0], sizes = [1, 32, 64], strides = [1, 1, 1]} : vector<3x32x64xf32> to vector<1x32x64xf32>
    %16 = vector.shape_cast %15 : vector<1x32x64xf32> to vector<32x64xf32>
    %cst_14 = arith.constant dense<0.000000e+00> : vector<64x64xf32>
    %17 = tpu.matmul %14, %16, %cst_14 {dimension_numbers = #tpu.dot_dimension_numbers<[1], [0], [0], [1], [0, 0, 1, 1], [], []>} : vector<64x32xf32>, vector<32x64xf32>, vector<64x64xf32> -> vector<64x64xf32>
    %18 = arith.truncf %17 : vector<64x64xf32> to vector<64x64xbf16>
    %c0_15 = arith.constant 0 : index
    %c1 = arith.constant 1 : index
    %c0_16 = arith.constant 0 : index
    %c0_17 = arith.constant 0 : index
    %19 = vector.load %arg4[%c0_15, %c1, %c0_16, %c0_17] : memref<1x3x64x64xbf16, #tpu.memory_space<vmem>>, vector<1x1x64x64xbf16>
    %20 = vector.shape_cast %19 : vector<1x1x64x64xbf16> to vector<64x64xbf16>
    %21 = vector.shape_cast %18 : vector<64x64xbf16> to vector<1x1x64x64xbf16>
    tpu.vector_store %arg4[%c0_15, %c1, %c0_16, %c0_17], %21 {strides = array<i32>} : memref<1x3x64x64xbf16, #tpu.memory_space<vmem>>, vector<1x1x64x64xbf16>,
    %c0_18 = arith.constant 0 : index
    %c0_19 = arith.constant 0 : index
    %22 = vector.load %arg3[%c0_18, %c0_19] : memref<64x32xf32, #tpu.memory_space<vmem>>, vector<64x32xf32>
    %23 = vector.extract_strided_slice %5 {offsets = [2, 0, 0], sizes = [1, 32, 64], strides = [1, 1, 1]} : vector<3x32x64xf32> to vector<1x32x64xf32>
    %24 = vector.shape_cast %23 : vector<1x32x64xf32> to vector<32x64xf32>
    %cst_20 = arith.constant dense<0.000000e+00> : vector<64x64xf32>
    %25 = tpu.matmul %22, %24, %cst_20 {dimension_numbers = #tpu.dot_dimension_numbers<[1], [0], [0], [1], [0, 0, 1, 1], [], []>} : vector<64x32xf32>, vector<32x64xf32>, vector<64x64xf32> -> vector<64x64xf32>
    %26 = arith.truncf %25 : vector<64x64xf32> to vector<64x64xbf16>
    %c0_21 = arith.constant 0 : index
    %c2 = arith.constant 2 : index
    %c0_22 = arith.constant 0 : index
    %c0_23 = arith.constant 0 : index
    %27 = vector.load %arg4[%c0_21, %c2, %c0_22, %c0_23] : memref<1x3x64x64xbf16, #tpu.memory_space<vmem>>, vector<1x1x64x64xbf16>
    %28 = vector.shape_cast %27 : vector<1x1x64x64xbf16> to vector<64x64xbf16>
    %29 = vector.shape_cast %26 : vector<64x64xbf16> to vector<1x1x64x64xbf16>
    tpu.vector_store %arg4[%c0_21, %c2, %c0_22, %c0_23], %29 {strides = array<i32>} : memref<1x3x64x64xbf16, #tpu.memory_space<vmem>>, vector<1x1x64x64xbf16>,
    return
  }
  func.func @transform_0(%arg0: i32) -> (i32, i32, i32, i32) {
    %c0_i32 = arith.constant 0 : i32
    %c0_i32_0 = arith.constant 0 : i32
    %c0_i32_1 = arith.constant 0 : i32
    %c0_i32_2 = arith.constant 0 : i32
    return %arg0, %c0_i32, %c0_i32_0, %c0_i32_1 : i32, i32, i32, i32
  }
  func.func @transform_1(%arg0: i32) -> (i32, i32) {
    %c0_i32 = arith.constant 0 : i32
    %c0_i32_0 = arith.constant 0 : i32
    %c0_i32_1 = arith.constant 0 : i32
    return %c0_i32, %c0_i32_0 : i32, i32
  }
  func.func @transform_2(%arg0: i32) -> (i32, i32) {
    %c0_i32 = arith.constant 0 : i32
    %c0_i32_0 = arith.constant 0 : i32
    %c0_i32_1 = arith.constant 0 : i32
    return %c0_i32, %c0_i32_0 : i32, i32
  }
  func.func @transform_3(%arg0: i32) -> (i32, i32, i32, i32) {
    %c0_i32 = arith.constant 0 : i32
    %c0_i32_0 = arith.constant 0 : i32
    %c0_i32_1 = arith.constant 0 : i32
    %c0_i32_2 = arith.constant 0 : i32
    return %arg0, %c0_i32, %c0_i32_0, %c0_i32_1 : i32, i32, i32, i32
  }
}

</mosaic_0001>

<llo_original>
// kernel: tpu_custom_call.1
$region0: #{tpu_custom_call.1}
  #allocation0 [shape = 'u32[]', space=smem, size = 0x4, offset = 0x4, fixed_abs, tag = 'smem constant byte address 0x4 - core index']
  #allocation1 [shape = 'u32[144,128]{1,0:T(1,128)}', space=vmem, size = 0x12000, scoped, tag = 'internal scratch']
  %s0 = inlined_call_operand.hbm [shape: f32[2,3,32,32], index: 0, kind: input, shape index: {}]
  %s1 = inlined_call_operand.vmem [shape: f32[32,64], index: 1, kind: input, shape index: {}]
  %s2 = inlined_call_operand.vmem [shape: f32[64,32], index: 2, kind: input, shape index: {}]
  %s3 = inlined_call_operand.hbm [shape: bf16[2,3,64,64], index: 3, kind: output, shape index: {}]
  %s4 = sld [smem:[#allocation0]]
  $region49: #{tpu_custom_call.1} parent=0
    _
  %s6 = ssub.s32 1, %s4
  %s7 = scalar_select 0, %s6, %s4
  $region1: #{tpu_custom_call.1} parent=0
    #allocation2 [shape = 'u8[98304]{0}', space=vmem, size = 0x18000, scoped, tag = 'input window, operand 0']
    #allocation3 [shape = 's32[2]{0}', space=sflag, size = 0x8, scoped, tag = 'scoped memory for tpu_custom_call.1']
    #allocation4 [shape = 's32[2]{0}', space=sflag, size = 0x8, scoped, tag = 'scoped memory for tpu_custom_call.1']
    #allocation5 [shape = 'u8[98304]{0}', space=vmem, size = 0x18000, scoped, tag = 'output window, operand 0']
    %8 = vsyncpa [#allocation3], 0
    %s9 = scalar_lea.sflag [#allocation3], 1
    %10 = vsyncpa %s9, 0
    %11 = vsyncpa [#allocation4], 0
    %s12 = scalar_lea.sflag [#allocation4], 1
    %13 = vsyncpa %s12, 0
    loop: start=0, step=1, limit=4
    $region2: #{tpu_custom_call.1} parent=1 // loop_pre_header
      _
    $region3: #{tpu_custom_call.1} parent=1 // loop_header
      %s15 = sphi 0, %s19
      %p16 = scmp.ge.s32.totalorder %s15, 4
      %s25 = sphi 0, %s27
      %s28 = sphi 0, %s25
      %s29 = sphi 0, %s28
      %s45 = sphi 0, %s29
      %s49 = sphi 0, %s49
      %s51 = sphi 0, %s49
      %s52 = sphi 0, %s51
      %s66 = sphi 0, %s52
      %s70 = sphi 0, %s70
      %s72 = sphi 0, %s70
      %s73 = sphi 0, %s72
      %s87 = sphi 0, %s73
      %s93 = sphi 0, %s95
      %s96 = sphi 0, %s93
      %s97 = sphi 0, %s96
      %s113 = sphi 0, %s97
    $region4: #{tpu_custom_call.1} parent=1 // loop_header_branch
      %18 = sbr.rel (%p16) target = $region8
    $region5: #{tpu_custom_call.1} parent=1 // loop_body
      %s20 = ssub.s32 %s15, 1
      %s21 = ssub.s32 %s15, 2
      %s22 = sadd.s32 %s15, 1
      %s23 = ssub.s32 %s15, %s22
      %p24 = scmp.eq.s32.totalorder %s23, 0
      %s26 = sadd.s32 %s25, 1
      %s27 = scalar_select %p24, %s25, %s26
      %p30 = pneg %p24
      %p31 = scmp.eq.s32.totalorder %s15, 1
      %p32 = por %p30, %p31
      %p33 = scmp.ne.s32.totalorder %s25, %s28
      %p34 = scmp.eq.s32.totalorder %s15, 0
      %p35 = por %p33, %p34
      %p36 = scmp.ne.s32.totalorder %s25, %s28
      %p37 = scmp.eq.s32.totalorder %s20, 1
      %p38 = por %p36, %p37
      %p39 = scmp.ne.s32.totalorder %s28, %s29
      %p40 = scmp.eq.s32.totalorder %s20, 0
      %p41 = por %p39, %p40
      %p42 = scmp.ne.s32.totalorder %s28, %s29
      %p43 = scmp.eq.s32.totalorder %s21, 1
      %p44 = por %p42, %p43
      %p46 = scmp.ne.s32.totalorder %s29, %s45
      %p47 = scmp.eq.s32.totalorder %s21, 0
      %p48 = por %p46, %p47
      %s50 = sadd.s32 %s49, 1
      %p53 = scmp.eq.s32.totalorder %s15, 1
      %p54 = scmp.ne.s32.totalorder %s49, %s51
      %p55 = scmp.eq.s32.totalorder %s15, 0
      %p56 = por %p54, %p55
      %p57 = scmp.ne.s32.totalorder %s49, %s51
      %p58 = scmp.eq.s32.totalorder %s20, 1
      %p59 = por %p57, %p58
      %p60 = scmp.ne.s32.totalorder %s51, %s52
      %p61 = scmp.eq.s32.totalorder %s20, 0
      %p62 = por %p60, %p61
      %p63 = scmp.ne.s32.totalorder %s51, %s52
      %p64 = scmp.eq.s32.totalorder %s21, 1
      %p65 = por %p63, %p64
      %p67 = scmp.ne.s32.totalorder %s52, %s66
      %p68 = scmp.eq.s32.totalorder %s21, 0
      %p69 = por %p67, %p68
      %s71 = sadd.s32 %s70, 1
      %p74 = scmp.eq.s32.totalorder %s15, 1
      %p75 = scmp.ne.s32.totalorder %s70, %s72
      %p76 = scmp.eq.s32.totalorder %s15, 0
      %p77 = por %p75, %p76
      %p78 = scmp.ne.s32.totalorder %s70, %s72
      %p79 = scmp.eq.s32.totalorder %s20, 1
      %p80 = por %p78, %p79
      %p81 = scmp.ne.s32.totalorder %s72, %s73
      %p82 = scmp.eq.s32.totalorder %s20, 0
      %p83 = por %p81, %p82
      %p84 = scmp.ne.s32.totalorder %s72, %s73
      %p85 = scmp.eq.s32.totalorder %s21, 1
      %p86 = por %p84, %p85
      %p88 = scmp.ne.s32.totalorder %s73, %s87
      %p89 = scmp.eq.s32.totalorder %s21, 0
      %p90 = por %p88, %p89
      %s91 = ssub.s32 %s15, %s22
      %p92 = scmp.eq.s32.totalorder %s91, 0
      %s94 = sadd.s32 %s93, 1
      %s95 = scalar_select %p92, %s93, %s94
      %p98 = pneg %p92
      %p99 = scmp.eq.s32.totalorder %s15, 1
      %p100 = por %p98, %p99
      %p101 = scmp.ne.s32.totalorder %s93, %s96
      %p102 = scmp.eq.s32.totalorder %s15, 0
      %p103 = por %p101, %p102
      %p104 = scmp.ne.s32.totalorder %s93, %s96
      %p105 = scmp.eq.s32.totalorder %s20, 1
      %p106 = por %p104, %p105
      %p107 = scmp.ne.s32.totalorder %s96, %s97
      %p108 = scmp.eq.s32.totalorder %s20, 0
      %p109 = por %p107, %p108
      %p110 = scmp.ne.s32.totalorder %s96, %s97
      %p111 = scmp.eq.s32.totalorder %s21, 1
      %p112 = por %p110, %p111
      %p114 = scmp.ne.s32.totalorder %s97, %s113
      %p115 = scmp.eq.s32.totalorder %s21, 0
      %p116 = por %p114, %p115
      %p117 = scmp.le.s32.totalorder 1, %s15
      %p118 = scmp.lt.s32.totalorder %s15, 3
      %p119 = pnand %p117, %p118
      %p120 = pneg %p119
      // Predicated region
      $region9: #{tpu_custom_call.1} parent=5 // pred_check
        _
      $region10: #{tpu_custom_call.1} parent=5 // pred_check_branch
        %122 = sbr.rel (%p119) target = $region12
      $region11: #{tpu_custom_call.1} parent=5 // pred_region
        %s123 = ssub.s32 %s15, 1
        // Predicated region
        $region13: #{tpu_custom_call.1} parent=11 // pred_check
          %p124 = pneg %p62
        $region14: #{tpu_custom_call.1} parent=11 // pred_check_branch
          %126 = sbr.rel (%p124) target = $region16
        $region15: #{tpu_custom_call.1} parent=11 // pred_region
          _
        $region16: #{tpu_custom_call.1} parent=11 // pred_fallthru
          _
        // Predicated region
        $region17: #{tpu_custom_call.1} parent=11 // pred_check
          %p127 = pneg %p83
        $region18: #{tpu_custom_call.1} parent=11 // pred_check_branch
          %129 = sbr.rel (%p127) target = $region20
        $region19: #{tpu_custom_call.1} parent=11 // pred_region
          _
        $region20: #{tpu_custom_call.1} parent=11 // pred_fallthru
          _
      $region12: #{tpu_custom_call.1} parent=5 // pred_fallthru
        _
      %p130 = scmp.lt.s32.totalorder %s15, 2
      // Predicated region
      $region21: #{tpu_custom_call.1} parent=5 // pred_check
        %p131 = pneg %p130
      $region22: #{tpu_custom_call.1} parent=5 // pred_check_branch
        %133 = sbr.rel (%p131) target = $region24
      $region23: #{tpu_custom_call.1} parent=5 // pred_region
        // Predicated region
        $region25: #{tpu_custom_call.1} parent=23 // pred_check
          %p134 = pneg %p35
        $region26: #{tpu_custom_call.1} parent=23 // pred_check_branch
          %136 = sbr.rel (%p134) target = $region28
        $region27: #{tpu_custom_call.1} parent=23 // pred_region
          %s137 = sand.u32 %s25, 1
          %s138 = scalar_lea.sflag [#allocation3], %s137
          %s139 = sand.u32 %s25, 1
          %s140 = smul.addr %s139, 96
          %s141 = scalar_lea.vmem [#allocation2], %s140
          %s143 = ssub.s32 1536, 1536
          %144 = vsyncadd %s138, %s143
          %s145 = smul.addr %s15, 12
          %s146 = smul.addr %s145, 128
          %s147 = scalar_lea.hbm %s0, %s146
          %s148 = sshll.u32 %s141, 4
          %s149 = int_to_ptr.vmem [resolvable:$true] %s148
          %154 = dma.hbm_to_vmem [thread:$0]  %s147, 1536, %s149, %s138, 128, 128, 8
        $region28: #{tpu_custom_call.1} parent=23 // pred_fallthru
          _
      $region24: #{tpu_custom_call.1} parent=5 // pred_fallthru
        _
      %p155 = scmp.le.s32.totalorder 1, %s15
      %p156 = scmp.lt.s32.totalorder %s15, 3
      %p157 = pnand %p155, %p156
      %p158 = pneg %p157
      // Predicated region
      $region29: #{tpu_custom_call.1} parent=5 // pred_check
        _
      $region30: #{tpu_custom_call.1} parent=5 // pred_check_branch
        %160 = sbr.rel (%p157) target = $region32
      $region31: #{tpu_custom_call.1} parent=5 // pred_region
        %s161 = ssub.s32 %s15, 1
        %s162 = sand.u32 %s28, 1
        %s163 = scalar_lea.sflag [#allocation3], %s162
        %s164 = sand.u32 %s28, 1
        %s165 = smul.addr %s164, 96
        %s166 = scalar_lea.vmem [#allocation2], %s165
        // Predicated region
        $region33: #{tpu_custom_call.1} parent=31 // pred_check
          %p167 = pneg %p41
        $region34: #{tpu_custom_call.1} parent=31 // pred_check_branch
          %169 = sbr.rel (%p167) target = $region36
        $region35: #{tpu_custom_call.1} parent=31 // pred_region
          %170 = dma.done %s163, 1536
        $region36: #{tpu_custom_call.1} parent=31 // pred_fallthru
          _
        %s171 = sand.u32 %s28, 1
        %s172 = scalar_lea.sflag [#allocation3], %s171
        %s173 = sand.u32 %s28, 1
        %s174 = smul.addr %s173, 96
        %s175 = scalar_lea.vmem [#allocation2], %s174
        %p176 = pneg %p41
        %p177 = pneg %p38
        %p178 = pneg %p62
        %p179 = pneg %p59
        %p180 = pneg %p83
        %p181 = pneg %p80
        %p182 = pneg %p109
        %p183 = pneg %p106
        %s184 = sand.u32 %s96, 1
        %s185 = scalar_lea.sflag [#allocation4], %s184
        %s186 = sand.u32 %s96, 1
        %s187 = smul.addr %s186, 96
        %s188 = scalar_lea.vmem [#allocation5], %s187
        %v189 = vld [vmem:[%s166] sm:$0xff]
        %v190 = vld [vmem:[%s166 + $0x8] sm:$0xff]
        %v191 = vld [vmem:[%s166 + $0x10] sm:$0xff]
        %v192 = vld [vmem:[%s166 + $0x18] sm:$0xff]
        %v193 = vld [vmem:[%s166 + $0x20] sm:$0xff]
        %v194 = vld [vmem:[%s166 + $0x28] sm:$0xff]
        %v195 = vld [vmem:[%s166 + $0x30] sm:$0xff]
        %v196 = vld [vmem:[%s166 + $0x38] sm:$0xff]
        %v197 = vld [vmem:[%s166 + $0x40] sm:$0xff]
        %v198 = vld [vmem:[%s166 + $0x48] sm:$0xff]
        %v199 = vld [vmem:[%s166 + $0x50] sm:$0xff]
        %v200 = vld [vmem:[%s166 + $0x58] sm:$0xff]
        %v201 = vld [vmem:[%s1] sm:$0xff]
        %v202 = vld [vmem:[%s1 + $0x8] sm:$0xff]
        %v203 = vld [vmem:[%s1 + $0x10] sm:$0xff]
        %v204 = vld [vmem:[%s1 + $0x18] sm:$0xff]
        %vm205 = vcmask 261120
        %v207 = vsel %vm205, %v189, 0
        %v210 = vsel %vm205, %v190, 0
        %v213 = vsel %vm205, %v191, 0
        %v216 = vsel %vm205, %v192, 0
        %v219 = vsel %vm205, %v193, 0
        %v222 = vsel %vm205, %v194, 0
        %v225 = vsel %vm205, %v195, 0
        %v228 = vsel %vm205, %v196, 0
        %v231 = vsel %vm205, %v197, 0
        %v234 = vsel %vm205, %v198, 0
        %v237 = vsel %vm205, %v199, 0
        %v240 = vsel %vm205, %v200, 0
        %242 = vmatprep.subr.mxu0 0.0
        %243 = vmatpush1.msra.mxu0 %v201
        %244 = vmatprep.subr.mxu0 0.0
        %245 = vmatpush1.msra.mxu0 %v202
        %246 = vmatprep.subr.mxu0 0.0
        %247 = vmatpush1.msra.mxu0 %v203
        %248 = vmatprep.subr.mxu0 0.0
        %249 = vmatpush1.msra.mxu0 %v204
        %250 = vmatprep.subr.mxu0 0.0
        %251 = vmatpush1.msra.mxu0 0.0
        %252 = vmatprep.subr.mxu0 0.0
        %253 = vmatpush1.msra.mxu0 0.0
        %254 = vmatprep.subr.mxu0 0.0
        %255 = vmatpush1.msra.mxu0 0.0
        %256 = vmatprep.subr.mxu0 0.0
        %257 = vmatpush1.msra.mxu0 0.0
        %258 = vmatprep.subr.mxu0 0.0
        %259 = vmatpush1.msra.mxu0 0.0
        %260 = vmatprep.subr.mxu0 0.0
        %261 = vmatpush1.msra.mxu0 0.0
        %262 = vmatprep.subr.mxu0 0.0
        %263 = vmatpush1.msra.mxu0 0.0
        %264 = vmatprep.subr.mxu0 0.0
        %265 = vmatpush1.msra.mxu0 0.0
        %266 = vmatprep.subr.mxu0 0.0
        %267 = vmatpush1.msra.mxu0 0.0
        %268 = vmatprep.subr.mxu0 0.0
        %269 = vmatpush1.msra.mxu0 0.0
        %270 = vmatprep.subr.mxu0 0.0
        %271 = vmatpush1.msra.mxu0 0.0
        %272 = vmatprep.subr.mxu0 0.0
        %273 = vmatpush1.msra.mxu0 0.0
        %274 = vmatprep.subr.mxu0 0.0
        %275 = vmatpush1.msra.mxu0 0.0
        %276 = vmatprep.subr.mxu0 0.0
        %277 = vmatpush1.msra.mxu0 0.0
        %278 = vmatprep.subr.mxu0 0.0
        %279 = vmatpush1.msra.mxu0 0.0
        %280 = vmatprep.subr.mxu0 0.0
        %281 = vmatpush1.msra.mxu0 0.0
        %282 = vmatprep.subr.mxu0 0.0
        %283 = vmatpush1.msra.mxu0 0.0
        %284 = vmatprep.subr.mxu0 0.0
        %285 = vmatpush1.msra.mxu0 0.0
        %286 = vmatprep.subr.mxu0 0.0
        %287 = vmatpush1.msra.mxu0 0.0
        %288 = vmatprep.subr.mxu0 0.0
        %289 = vmatpush1.msra.mxu0 0.0
        %290 = vmatprep.subr.mxu0 0.0
        %291 = vmatpush1.msra.mxu0 0.0
        %292 = vmatprep.subr.mxu0 0.0
        %293 = vmatpush1.msra.mxu0 0.0
        %294 = vmatprep.subr.mxu0 0.0
        %295 = vmatpush1.msra.mxu0 0.0
        %296 = vmatprep.subr.mxu0 0.0
        %297 = vmatpush1.msra.mxu0 0.0
        %298 = vmatprep.subr.mxu0 0.0
        %299 = vmatpush1.msra.mxu0 0.0
        %300 = vmatprep.subr.mxu0 0.0
        %301 = vmatpush1.msra.mxu0 0.0
        %302 = vmatprep.subr.mxu0 0.0
        %303 = vmatpush1.msra.mxu0 0.0
        %304 = vmatprep.subr.mxu0 0.0
        %305 = vmatpush1.msra.mxu0 0.0
        %306 = vmatprep.mubr.f32.mxu0 0.0
        %307 = vmatmul.mubr.f32.gmra.mrb[0].mxu0 %v207
        %v308 = vpop.f32.mrb[0].mxu0
        %v309 = vadd.f32 0.0, %v308
        %v310 = vpop.f32.mrb[0].mxu0
        %311 = vmatprep.mubr.f32.mxu0 0.0
        %312 = vmatmul.mubr.f32.gmra.mrb[0].mxu0 %v210
        %v313 = vpop.f32.mrb[0].mxu0
        %v314 = vadd.f32 0.0, %v313
        %v315 = vpop.f32.mrb[0].mxu0
        %316 = vmatprep.mubr.f32.mxu0 0.0
        %317 = vmatmul.mubr.f32.gmra.mrb[0].mxu0 %v213
        %v318 = vpop.f32.mrb[0].mxu0
        %v319 = vadd.f32 0.0, %v318
        %v320 = vpop.f32.mrb[0].mxu0
        %321 = vmatprep.mubr.f32.mxu0 0.0
        %322 = vmatmul.mubr.f32.gmra.mrb[0].mxu0 %v216
        %v323 = vpop.f32.mrb[0].mxu0
        %v324 = vadd.f32 0.0, %v323
        %v325 = vpop.f32.mrb[0].mxu0
        %326 = vmatprep.mubr.f32.mxu0 0.0
        %327 = vmatmul.mubr.f32.gmra.mrb[0].mxu0 %v219
        %v328 = vpop.f32.mrb[0].mxu0
        %v329 = vadd.f32 0.0, %v328
        %v330 = vpop.f32.mrb[0].mxu0
        %331 = vmatprep.mubr.f32.mxu0 0.0
        %332 = vmatmul.mubr.f32.gmra.mrb[0].mxu0 %v222
        %v333 = vpop.f32.mrb[0].mxu0
        %v334 = vadd.f32 0.0, %v333
        %v335 = vpop.f32.mrb[0].mxu0
        %336 = vmatprep.mubr.f32.mxu0 0.0
        %337 = vmatmul.mubr.f32.gmra.mrb[0].mxu0 %v225
        %v338 = vpop.f32.mrb[0].mxu0
        %v339 = vadd.f32 0.0, %v338
        %v340 = vpop.f32.mrb[0].mxu0
        %341 = vmatprep.mubr.f32.mxu0 0.0
        %342 = vmatmul.mubr.f32.gmra.mrb[0].mxu0 %v228
        %v343 = vpop.f32.mrb[0].mxu0
        %v344 = vadd.f32 0.0, %v343
        %v345 = vpop.f32.mrb[0].mxu0
        %346 = vmatprep.mubr.f32.mxu0 0.0
        %347 = vmatmul.mubr.f32.gmra.mrb[0].mxu0 %v231
        %v348 = vpop.f32.mrb[0].mxu0
        %v349 = vadd.f32 0.0, %v348
        %v350 = vpop.f32.mrb[0].mxu0
        %351 = vmatprep.mubr.f32.mxu0 0.0
        %352 = vmatmul.mubr.f32.gmra.mrb[0].mxu0 %v234
        %v353 = vpop.f32.mrb[0].mxu0
        %v354 = vadd.f32 0.0, %v353
        %v355 = vpop.f32.mrb[0].mxu0
        %356 = vmatprep.mubr.f32.mxu0 0.0
        %357 = vmatmul.mubr.f32.gmra.mrb[0].mxu0 %v237
        %v358 = vpop.f32.mrb[0].mxu0
        %v359 = vadd.f32 0.0, %v358
        %v360 = vpop.f32.mrb[0].mxu0
        %361 = vmatprep.mubr.f32.mxu0 0.0
        %362 = vmatmul.mubr.f32.gmra.mrb[0].mxu0 %v240
        %v363 = vpop.f32.mrb[0].mxu0
        %v364 = vadd.f32 0.0, %v363
        %v365 = vpop.f32.mrb[0].mxu0
        %366 = vdwg.mxu0
        %v367 = vld [vmem:[%s2] sm:$0xff]
        %v368 = vld [vmem:[%s2 + $0x8] sm:$0xff]
        %v369 = vld [vmem:[%s2 + $0x10] sm:$0xff]
        %v370 = vld [vmem:[%s2 + $0x18] sm:$0xff]
        %v371 = vld [vmem:[%s2 + $0x20] sm:$0xff]
        %v372 = vld [vmem:[%s2 + $0x28] sm:$0xff]
        %v373 = vld [vmem:[%s2 + $0x30] sm:$0xff]
        %v374 = vld [vmem:[%s2 + $0x38] sm:$0xff]
        %v376 = vsel %vm205, %v367, 0
        %v379 = vsel %vm205, %v368, 0
        %v382 = vsel %vm205, %v369, 0
        %v385 = vsel %vm205, %v370, 0
        %v388 = vsel %vm205, %v371, 0
        %v391 = vsel %vm205, %v372, 0
        %v394 = vsel %vm205, %v373, 0
        %v397 = vsel %vm205, %v374, 0
        %399 = vmatprep.subr.mxu0 0.0
        %400 = vmatpush1.msra.mxu0 %v309
        %401 = vmatprep.subr.mxu0 0.0
        %402 = vmatpush1.msra.mxu0 %v314
        %403 = vmatprep.subr.mxu0 0.0
        %404 = vmatpush1.msra.mxu0 %v319
        %405 = vmatprep.subr.mxu0 0.0
        %406 = vmatpush1.msra.mxu0 %v324
        %407 = vmatprep.subr.mxu0 0.0
        %408 = vmatpush1.msra.mxu0 0.0
        %409 = vmatprep.subr.mxu0 0.0
        %410 = vmatpush1.msra.mxu0 0.0
        %411 = vmatprep.subr.mxu0 0.0
        %412 = vmatpush1.msra.mxu0 0.0
        %413 = vmatprep.subr.mxu0 0.0
        %414 = vmatpush1.msra.mxu0 0.0
        %415 = vmatprep.subr.mxu0 0.0
        %416 = vmatpush1.msra.mxu0 0.0
        %417 = vmatprep.subr.mxu0 0.0
        %418 = vmatpush1.msra.mxu0 0.0
        %419 = vmatprep.subr.mxu0 0.0
        %420 = vmatpush1.msra.mxu0 0.0
        %421 = vmatprep.subr.mxu0 0.0
        %422 = vmatpush1.msra.mxu0 0.0
        %423 = vmatprep.subr.mxu0 0.0
        %424 = vmatpush1.msra.mxu0 0.0
        %425 = vmatprep.subr.mxu0 0.0
        %426 = vmatpush1.msra.mxu0 0.0
        %427 = vmatprep.subr.mxu0 0.0
        %428 = vmatpush1.msra.mxu0 0.0
        %429 = vmatprep.subr.mxu0 0.0
        %430 = vmatpush1.msra.mxu0 0.0
        %431 = vmatprep.subr.mxu0 0.0
        %432 = vmatpush1.msra.mxu0 0.0
        %433 = vmatprep.subr.mxu0 0.0
        %434 = vmatpush1.msra.mxu0 0.0
        %435 = vmatprep.subr.mxu0 0.0
        %436 = vmatpush1.msra.mxu0 0.0
        %437 = vmatprep.subr.mxu0 0.0
        %438 = vmatpush1.msra.mxu0 0.0
        %439 = vmatprep.subr.mxu0 0.0
        %440 = vmatpush1.msra.mxu0 0.0
        %441 = vmatprep.subr.mxu0 0.0
        %442 = vmatpush1.msra.mxu0 0.0
        %443 = vmatprep.subr.mxu0 0.0
        %444 = vmatpush1.msra.mxu0 0.0
        %445 = vmatprep.subr.mxu0 0.0
        %446 = vmatpush1.msra.mxu0 0.0
        %447 = vmatprep.subr.mxu0 0.0
        %448 = vmatpush1.msra.mxu0 0.0
        %449 = vmatprep.subr.mxu0 0.0
        %450 = vmatpush1.msra.mxu0 0.0
        %451 = vmatprep.subr.mxu0 0.0
        %452 = vmatpush1.msra.mxu0 0.0
        %453 = vmatprep.subr.mxu0 0.0
        %454 = vmatpush1.msra.mxu0 0.0
        %455 = vmatprep.subr.mxu0 0.0
        %456 = vmatpush1.msra.mxu0 0.0
        %457 = vmatprep.subr.mxu0 0.0
        %458 = vmatpush1.msra.mxu0 0.0
        %459 = vmatprep.subr.mxu0 0.0
        %460 = vmatpush1.msra.mxu0 0.0
        %461 = vmatprep.subr.mxu0 0.0
        %462 = vmatpush1.msra.mxu0 0.0
        %463 = vmatprep.mubr.f32.mxu0 0.0
        %464 = vmatmul.mubr.f32.gmra.mrb[0].mxu0 %v376
        %v465 = vpop.f32.mrb[0].mxu0
        %v466 = vadd.f32 0.0, %v465
        %v467 = vpop.f32.mrb[0].mxu0
        %468 = vmatprep.mubr.f32.mxu0 0.0
        %469 = vmatmul.mubr.f32.gmra.mrb[0].mxu0 %v379
        %v470 = vpop.f32.mrb[0].mxu0
        %v471 = vadd.f32 0.0, %v470
        %v472 = vpop.f32.mrb[0].mxu0
        %473 = vmatprep.mubr.f32.mxu0 0.0
        %474 = vmatmul.mubr.f32.gmra.mrb[0].mxu0 %v382
        %v475 = vpop.f32.mrb[0].mxu0
        %v476 = vadd.f32 0.0, %v475
        %v477 = vpop.f32.mrb[0].mxu0
        %478 = vmatprep.mubr.f32.mxu0 0.0
        %479 = vmatmul.mubr.f32.gmra.mrb[0].mxu0 %v385
        %v480 = vpop.f32.mrb[0].mxu0
        %v481 = vadd.f32 0.0, %v480
        %v482 = vpop.f32.mrb[0].mxu0
        %483 = vmatprep.mubr.f32.mxu0 0.0
        %484 = vmatmul.mubr.f32.gmra.mrb[0].mxu0 %v388
        %v485 = vpop.f32.mrb[0].mxu0
        %v486 = vadd.f32 0.0, %v485
        %v487 = vpop.f32.mrb[0].mxu0
        %488 = vmatprep.mubr.f32.mxu0 0.0
        %489 = vmatmul.mubr.f32.gmra.mrb[0].mxu0 %v391
        %v490 = vpop.f32.mrb[0].mxu0
        %v491 = vadd.f32 0.0, %v490
        %v492 = vpop.f32.mrb[0].mxu0
        %493 = vmatprep.mubr.f32.mxu0 0.0
        %494 = vmatmul.mubr.f32.gmra.mrb[0].mxu0 %v394
        %v495 = vpop.f32.mrb[0].mxu0
        %v496 = vadd.f32 0.0, %v495
        %v497 = vpop.f32.mrb[0].mxu0
        %498 = vmatprep.mubr.f32.mxu0 0.0
        %499 = vmatmul.mubr.f32.gmra.mrb[0].mxu0 %v397
        %v500 = vpop.f32.mrb[0].mxu0
        %v501 = vadd.f32 0.0, %v500
        %v502 = vpop.f32.mrb[0].mxu0
        %503 = vdwg.mxu0
        %v504 = vpack.c.bf16 %v471, %v466
        %v505 = vpack.c.bf16 %v481, %v476
        %v506 = vpack.c.bf16 %v491, %v486
        %v507 = vpack.c.bf16 %v501, %v496
        %v512 = vunpack.c.l.b16 %v504
        %v513 = vunpack.c.h.b16 %v504
        %v514 = vunpack.c.l.b16 %v505
        %v515 = vunpack.c.h.b16 %v505
        %v516 = vunpack.c.l.b16 %v506
        %v517 = vunpack.c.h.b16 %v506
        %v518 = vunpack.c.l.b16 %v507
        %v519 = vunpack.c.h.b16 %v507
        %v520 = vpack.c.b16 %v512, %v512
        %v521 = vpack.c.b16 %v513, %v513
        %v522 = vpack.c.b16 %v514, %v514
        %v523 = vpack.c.b16 %v515, %v515
        %v524 = vpack.c.b16 %v516, %v516
        %v525 = vpack.c.b16 %v517, %v517
        %v526 = vpack.c.b16 %v518, %v518
        %v527 = vpack.c.b16 %v519, %v519
        %vm536 = vcmask 519168
        %537 = vst.msk [vmem:[%s188] sm:$0xf] %vm536, %v520
        %538 = vst.msk [vmem:[%s188 + $0x4] sm:$0xf] %vm536, %v521
        %539 = vst.msk [vmem:[%s188 + $0x8] sm:$0xf] %vm536, %v522
        %540 = vst.msk [vmem:[%s188 + $0xc] sm:$0xf] %vm536, %v523
        %541 = vst.msk [vmem:[%s188 + $0x10] sm:$0xf] %vm536, %v524
        %542 = vst.msk [vmem:[%s188 + $0x14] sm:$0xf] %vm536, %v525
        %543 = vst.msk [vmem:[%s188 + $0x18] sm:$0xf] %vm536, %v526
        %544 = vst.msk [vmem:[%s188 + $0x1c] sm:$0xf] %vm536, %v527
        %v545 = vld [vmem:[%s2] sm:$0xff]
        %v546 = vld [vmem:[%s2 + $0x8] sm:$0xff]
        %v547 = vld [vmem:[%s2 + $0x10] sm:$0xff]
        %v548 = vld [vmem:[%s2 + $0x18] sm:$0xff]
        %v549 = vld [vmem:[%s2 + $0x20] sm:$0xff]
        %v550 = vld [vmem:[%s2 + $0x28] sm:$0xff]
        %v551 = vld [vmem:[%s2 + $0x30] sm:$0xff]
        %v552 = vld [vmem:[%s2 + $0x38] sm:$0xff]
        %v554 = vsel %vm205, %v545, 0
        %v557 = vsel %vm205, %v546, 0
        %v560 = vsel %vm205, %v547, 0
        %v563 = vsel %vm205, %v548, 0
        %v566 = vsel %vm205, %v549, 0
        %v569 = vsel %vm205, %v550, 0
        %v572 = vsel %vm205, %v551, 0
        %v575 = vsel %vm205, %v552, 0
        %577 = vmatprep.subr.mxu0 0.0
        %578 = vmatpush1.msra.mxu0 %v329
        %579 = vmatprep.subr.mxu0 0.0
        %580 = vmatpush1.msra.mxu0 %v334
        %581 = vmatprep.subr.mxu0 0.0
        %582 = vmatpush1.msra.mxu0 %v339
        %583 = vmatprep.subr.mxu0 0.0
        %584 = vmatpush1.msra.mxu0 %v344
        %585 = vmatprep.subr.mxu0 0.0
        %586 = vmatpush1.msra.mxu0 0.0
        %587 = vmatprep.subr.mxu0 0.0
        %588 = vmatpush1.msra.mxu0 0.0
        %589 = vmatprep.subr.mxu0 0.0
        %590 = vmatpush1.msra.mxu0 0.0
        %591 = vmatprep.subr.mxu0 0.0
        %592 = vmatpush1.msra.mxu0 0.0
        %593 = vmatprep.subr.mxu0 0.0
        %594 = vmatpush1.msra.mxu0 0.0
        %595 = vmatprep.subr.mxu0 0.0
        %596 = vmatpush1.msra.mxu0 0.0
        %597 = vmatprep.subr.mxu0 0.0
        %598 = vmatpush1.msra.mxu0 0.0
        %599 = vmatprep.subr.mxu0 0.0
        %600 = vmatpush1.msra.mxu0 0.0
        %601 = vmatprep.subr.mxu0 0.0
        %602 = vmatpush1.msra.mxu0 0.0
        %603 = vmatprep.subr.mxu0 0.0
        %604 = vmatpush1.msra.mxu0 0.0
        %605 = vmatprep.subr.mxu0 0.0
        %606 = vmatpush1.msra.mxu0 0.0
        %607 = vmatprep.subr.mxu0 0.0
        %608 = vmatpush1.msra.mxu0 0.0
        %609 = vmatprep.subr.mxu0 0.0
        %610 = vmatpush1.msra.mxu0 0.0
        %611 = vmatprep.subr.mxu0 0.0
        %612 = vmatpush1.msra.mxu0 0.0
        %613 = vmatprep.subr.mxu0 0.0
        %614 = vmatpush1.msra.mxu0 0.0
        %615 = vmatprep.subr.mxu0 0.0
        %616 = vmatpush1.msra.mxu0 0.0
        %617 = vmatprep.subr.mxu0 0.0
        %618 = vmatpush1.msra.mxu0 0.0
        %619 = vmatprep.subr.mxu0 0.0
        %620 = vmatpush1.msra.mxu0 0.0
        %621 = vmatprep.subr.mxu0 0.0
        %622 = vmatpush1.msra.mxu0 0.0
        %623 = vmatprep.subr.mxu0 0.0
        %624 = vmatpush1.msra.mxu0 0.0
        %625 = vmatprep.subr.mxu0 0.0
        %626 = vmatpush1.msra.mxu0 0.0
        %627 = vmatprep.subr.mxu0 0.0
        %628 = vmatpush1.msra.mxu0 0.0
        %629 = vmatprep.subr.mxu0 0.0
        %630 = vmatpush1.msra.mxu0 0.0
        %631 = vmatprep.subr.mxu0 0.0
        %632 = vmatpush1.msra.mxu0 0.0
        %633 = vmatprep.subr.mxu0 0.0
        %634 = vmatpush1.msra.mxu0 0.0
        %635 = vmatprep.subr.mxu0 0.0
        %636 = vmatpush1.msra.mxu0 0.0
        %637 = vmatprep.subr.mxu0 0.0
        %638 = vmatpush1.msra.mxu0 0.0
        %639 = vmatprep.subr.mxu0 0.0
        %640 = vmatpush1.msra.mxu0 0.0
        %641 = vmatprep.mubr.f32.mxu0 0.0
        %642 = vmatmul.mubr.f32.gmra.mrb[0].mxu0 %v554
        %v643 = vpop.f32.mrb[0].mxu0
        %v644 = vadd.f32 0.0, %v643
        %v645 = vpop.f32.mrb[0].mxu0
        %646 = vmatprep.mubr.f32.mxu0 0.0
        %647 = vmatmul.mubr.f32.gmra.mrb[0].mxu0 %v557
        %v648 = vpop.f32.mrb[0].mxu0
        %v649 = vadd.f32 0.0, %v648
        %v650 = vpop.f32.mrb[0].mxu0
        %651 = vmatprep.mubr.f32.mxu0 0.0
        %652 = vmatmul.mubr.f32.gmra.mrb[0].mxu0 %v560
        %v653 = vpop.f32.mrb[0].mxu0
        %v654 = vadd.f32 0.0, %v653
        %v655 = vpop.f32.mrb[0].mxu0
        %656 = vmatprep.mubr.f32.mxu0 0.0
        %657 = vmatmul.mubr.f32.gmra.mrb[0].mxu0 %v563
        %v658 = vpop.f32.mrb[0].mxu0
        %v659 = vadd.f32 0.0, %v658
        %v660 = vpop.f32.mrb[0].mxu0
        %661 = vmatprep.mubr.f32.mxu0 0.0
        %662 = vmatmul.mubr.f32.gmra.mrb[0].mxu0 %v566
        %v663 = vpop.f32.mrb[0].mxu0
        %v664 = vadd.f32 0.0, %v663
        %v665 = vpop.f32.mrb[0].mxu0
        %666 = vmatprep.mubr.f32.mxu0 0.0
        %667 = vmatmul.mubr.f32.gmra.mrb[0].mxu0 %v569
        %v668 = vpop.f32.mrb[0].mxu0
        %v669 = vadd.f32 0.0, %v668
        %v670 = vpop.f32.mrb[0].mxu0
        %671 = vmatprep.mubr.f32.mxu0 0.0
        %672 = vmatmul.mubr.f32.gmra.mrb[0].mxu0 %v572
        %v673 = vpop.f32.mrb[0].mxu0
        %v674 = vadd.f32 0.0, %v673
        %v675 = vpop.f32.mrb[0].mxu0
        %676 = vmatprep.mubr.f32.mxu0 0.0
        %677 = vmatmul.mubr.f32.gmra.mrb[0].mxu0 %v575
        %v678 = vpop.f32.mrb[0].mxu0
        %v679 = vadd.f32 0.0, %v678
        %v680 = vpop.f32.mrb[0].mxu0
        %681 = vdwg.mxu0
        %v682 = vpack.c.bf16 %v649, %v644
        %v683 = vpack.c.bf16 %v659, %v654
        %v684 = vpack.c.bf16 %v669, %v664
        %v685 = vpack.c.bf16 %v679, %v674
        %v690 = vunpack.c.l.b16 %v682
        %v691 = vunpack.c.h.b16 %v682
        %v692 = vunpack.c.l.b16 %v683
        %v693 = vunpack.c.h.b16 %v683
        %v694 = vunpack.c.l.b16 %v684
        %v695 = vunpack.c.h.b16 %v684
        %v696 = vunpack.c.l.b16 %v685
        %v697 = vunpack.c.h.b16 %v685
        %v698 = vpack.c.b16 %v690, %v690
        %v699 = vpack.c.b16 %v691, %v691
        %v700 = vpack.c.b16 %v692, %v692
        %v701 = vpack.c.b16 %v693, %v693
        %v702 = vpack.c.b16 %v694, %v694
        %v703 = vpack.c.b16 %v695, %v695
        %v704 = vpack.c.b16 %v696, %v696
        %v705 = vpack.c.b16 %v697, %v697
        %s714 = scalar_lea.vmem %s188, 32 [#allocation5]
        %715 = vst.msk [vmem:[%s714] sm:$0xf] %vm536, %v698
        %716 = vst.msk [vmem:[%s714 + $0x4] sm:$0xf] %vm536, %v699
        %717 = vst.msk [vmem:[%s714 + $0x8] sm:$0xf] %vm536, %v700
        %718 = vst.msk [vmem:[%s714 + $0xc] sm:$0xf] %vm536, %v701
        %719 = vst.msk [vmem:[%s714 + $0x10] sm:$0xf] %vm536, %v702
        %720 = vst.msk [vmem:[%s714 + $0x14] sm:$0xf] %vm536, %v703
        %721 = vst.msk [vmem:[%s714 + $0x18] sm:$0xf] %vm536, %v704
        %722 = vst.msk [vmem:[%s714 + $0x1c] sm:$0xf] %vm536, %v705
        %v723 = vld [vmem:[%s2] sm:$0xff]
        %v724 = vld [vmem:[%s2 + $0x8] sm:$0xff]
        %v725 = vld [vmem:[%s2 + $0x10] sm:$0xff]
        %v726 = vld [vmem:[%s2 + $0x18] sm:$0xff]
        %v727 = vld [vmem:[%s2 + $0x20] sm:$0xff]
        %v728 = vld [vmem:[%s2 + $0x28] sm:$0xff]
        %v729 = vld [vmem:[%s2 + $0x30] sm:$0xff]
        %v730 = vld [vmem:[%s2 + $0x38] sm:$0xff]
        %v732 = vsel %vm205, %v723, 0
        %v735 = vsel %vm205, %v724, 0
        %v738 = vsel %vm205, %v725, 0
        %v741 = vsel %vm205, %v726, 0
        %v744 = vsel %vm205, %v727, 0
        %v747 = vsel %vm205, %v728, 0
        %v750 = vsel %vm205, %v729, 0
        %v753 = vsel %vm205, %v730, 0
        %755 = vmatprep.subr.mxu0 0.0
        %756 = vmatpush1.msra.mxu0 %v349
        %757 = vmatprep.subr.mxu0 0.0
        %758 = vmatpush1.msra.mxu0 %v354
        %759 = vmatprep.subr.mxu0 0.0
        %760 = vmatpush1.msra.mxu0 %v359
        %761 = vmatprep.subr.mxu0 0.0
        %762 = vmatpush1.msra.mxu0 %v364
        %763 = vmatprep.subr.mxu0 0.0
        %764 = vmatpush1.msra.mxu0 0.0
        %765 = vmatprep.subr.mxu0 0.0
        %766 = vmatpush1.msra.mxu0 0.0
        %767 = vmatprep.subr.mxu0 0.0
        %768 = vmatpush1.msra.mxu0 0.0
        %769 = vmatprep.subr.mxu0 0.0
        %770 = vmatpush1.msra.mxu0 0.0
        %771 = vmatprep.subr.mxu0 0.0
        %772 = vmatpush1.msra.mxu0 0.0
        %773 = vmatprep.subr.mxu0 0.0
        %774 = vmatpush1.msra.mxu0 0.0
        %775 = vmatprep.subr.mxu0 0.0
        %776 = vmatpush1.msra.mxu0 0.0
        %777 = vmatprep.subr.mxu0 0.0
        %778 = vmatpush1.msra.mxu0 0.0
        %779 = vmatprep.subr.mxu0 0.0
        %780 = vmatpush1.msra.mxu0 0.0
        %781 = vmatprep.subr.mxu0 0.0
        %782 = vmatpush1.msra.mxu0 0.0
        %783 = vmatprep.subr.mxu0 0.0
        %784 = vmatpush1.msra.mxu0 0.0
        %785 = vmatprep.subr.mxu0 0.0
        %786 = vmatpush1.msra.mxu0 0.0
        %787 = vmatprep.subr.mxu0 0.0
        %788 = vmatpush1.msra.mxu0 0.0
        %789 = vmatprep.subr.mxu0 0.0
        %790 = vmatpush1.msra.mxu0 0.0
        %791 = vmatprep.subr.mxu0 0.0
        %792 = vmatpush1.msra.mxu0 0.0
        %793 = vmatprep.subr.mxu0 0.0
        %794 = vmatpush1.msra.mxu0 0.0
        %795 = vmatprep.subr.mxu0 0.0
        %796 = vmatpush1.msra.mxu0 0.0
        %797 = vmatprep.subr.mxu0 0.0
        %798 = vmatpush1.msra.mxu0 0.0
        %799 = vmatprep.subr.mxu0 0.0
        %800 = vmatpush1.msra.mxu0 0.0
        %801 = vmatprep.subr.mxu0 0.0
        %802 = vmatpush1.msra.mxu0 0.0
        %803 = vmatprep.subr.mxu0 0.0
        %804 = vmatpush1.msra.mxu0 0.0
        %805 = vmatprep.subr.mxu0 0.0
        %806 = vmatpush1.msra.mxu0 0.0
        %807 = vmatprep.subr.mxu0 0.0
        %808 = vmatpush1.msra.mxu0 0.0
        %809 = vmatprep.subr.mxu0 0.0
        %810 = vmatpush1.msra.mxu0 0.0
        %811 = vmatprep.subr.mxu0 0.0
        %812 = vmatpush1.msra.mxu0 0.0
        %813 = vmatprep.subr.mxu0 0.0
        %814 = vmatpush1.msra.mxu0 0.0
        %815 = vmatprep.subr.mxu0 0.0
        %816 = vmatpush1.msra.mxu0 0.0
        %817 = vmatprep.subr.mxu0 0.0
        %818 = vmatpush1.msra.mxu0 0.0
        %819 = vmatprep.mubr.f32.mxu0 0.0
        %820 = vmatmul.mubr.f32.gmra.mrb[0].mxu0 %v732
        %v821 = vpop.f32.mrb[0].mxu0
        %v822 = vadd.f32 0.0, %v821
        %v823 = vpop.f32.mrb[0].mxu0
        %824 = vmatprep.mubr.f32.mxu0 0.0
        %825 = vmatmul.mubr.f32.gmra.mrb[0].mxu0 %v735
        %v826 = vpop.f32.mrb[0].mxu0
        %v827 = vadd.f32 0.0, %v826
        %v828 = vpop.f32.mrb[0].mxu0
        %829 = vmatprep.mubr.f32.mxu0 0.0
        %830 = vmatmul.mubr.f32.gmra.mrb[0].mxu0 %v738
        %v831 = vpop.f32.mrb[0].mxu0
        %v832 = vadd.f32 0.0, %v831
        %v833 = vpop.f32.mrb[0].mxu0
        %834 = vmatprep.mubr.f32.mxu0 0.0
        %835 = vmatmul.mubr.f32.gmra.mrb[0].mxu0 %v741
        %v836 = vpop.f32.mrb[0].mxu0
        %v837 = vadd.f32 0.0, %v836
        %v838 = vpop.f32.mrb[0].mxu0
        %839 = vmatprep.mubr.f32.mxu0 0.0
        %840 = vmatmul.mubr.f32.gmra.mrb[0].mxu0 %v744
        %v841 = vpop.f32.mrb[0].mxu0
        %v842 = vadd.f32 0.0, %v841
        %v843 = vpop.f32.mrb[0].mxu0
        %844 = vmatprep.mubr.f32.mxu0 0.0
        %845 = vmatmul.mubr.f32.gmra.mrb[0].mxu0 %v747
        %v846 = vpop.f32.mrb[0].mxu0
        %v847 = vadd.f32 0.0, %v846
        %v848 = vpop.f32.mrb[0].mxu0
        %849 = vmatprep.mubr.f32.mxu0 0.0
        %850 = vmatmul.mubr.f32.gmra.mrb[0].mxu0 %v750
        %v851 = vpop.f32.mrb[0].mxu0
        %v852 = vadd.f32 0.0, %v851
        %v853 = vpop.f32.mrb[0].mxu0
        %854 = vmatprep.mubr.f32.mxu0 0.0
        %855 = vmatmul.mubr.f32.gmra.mrb[0].mxu0 %v753
        %v856 = vpop.f32.mrb[0].mxu0
        %v857 = vadd.f32 0.0, %v856
        %v858 = vpop.f32.mrb[0].mxu0
        %859 = vdwg.mxu0
        %v860 = vpack.c.bf16 %v827, %v822
        %v861 = vpack.c.bf16 %v837, %v832
        %v862 = vpack.c.bf16 %v847, %v842
        %v863 = vpack.c.bf16 %v857, %v852
        %v868 = vunpack.c.l.b16 %v860
        %v869 = vunpack.c.h.b16 %v860
        %v870 = vunpack.c.l.b16 %v861
        %v871 = vunpack.c.h.b16 %v861
        %v872 = vunpack.c.l.b16 %v862
        %v873 = vunpack.c.h.b16 %v862
        %v874 = vunpack.c.l.b16 %v863
        %v875 = vunpack.c.h.b16 %v863
        %v876 = vpack.c.b16 %v868, %v868
        %v877 = vpack.c.b16 %v869, %v869
        %v878 = vpack.c.b16 %v870, %v870
        %v879 = vpack.c.b16 %v871, %v871
        %v880 = vpack.c.b16 %v872, %v872
        %v881 = vpack.c.b16 %v873, %v873
        %v882 = vpack.c.b16 %v874, %v874
        %v883 = vpack.c.b16 %v875, %v875
        %s892 = scalar_lea.vmem %s188, 64 [#allocation5]
        %893 = vst.msk [vmem:[%s892] sm:$0xf] %vm536, %v876
        %894 = vst.msk [vmem:[%s892 + $0x4] sm:$0xf] %vm536, %v877
        %895 = vst.msk [vmem:[%s892 + $0x8] sm:$0xf] %vm536, %v878
        %896 = vst.msk [vmem:[%s892 + $0xc] sm:$0xf] %vm536, %v879
        %897 = vst.msk [vmem:[%s892 + $0x10] sm:$0xf] %vm536, %v880
        %898 = vst.msk [vmem:[%s892 + $0x14] sm:$0xf] %vm536, %v881
        %899 = vst.msk [vmem:[%s892 + $0x18] sm:$0xf] %vm536, %v882
        %900 = vst.msk [vmem:[%s892 + $0x1c] sm:$0xf] %vm536, %v883
        %s901 = sand.u32 %s96, 1
        %s902 = scalar_lea.sflag [#allocation4], %s901
        %s903 = sand.u32 %s96, 1
        %s904 = smul.addr %s903, 96
        %s905 = scalar_lea.vmem [#allocation5], %s904
        // Predicated region
        $region37: #{tpu_custom_call.1} parent=31 // pred_check
          %p906 = pneg %p106
        $region38: #{tpu_custom_call.1} parent=31 // pred_check_branch
          %908 = sbr.rel (%p906) target = $region40
        $region39: #{tpu_custom_call.1} parent=31 // pred_region
          %s910 = ssub.s32 1536, 1536
          %911 = vsyncadd %s902, %s910
          %s912 = smul.addr %s20, 24
          %s913 = smul.addr %s912, 64
          %s914 = scalar_lea.hbm %s3, %s913
          %s915 = sshll.u32 %s905, 4
          %s916 = int_to_ptr.vmem [resolvable:$true] %s915
          %921 = dma.vmem_to_hbm [thread:$0]  %s916, 1536, %s914, %s902, 64, 64, 4
        $region40: #{tpu_custom_call.1} parent=31 // pred_fallthru
          _
      $region32: #{tpu_custom_call.1} parent=5 // pred_fallthru
        _
      %p922 = scmp.le.s32.totalorder 2, %s15
      // Predicated region
      $region41: #{tpu_custom_call.1} parent=5 // pred_check
        %p923 = pneg %p922
      $region42: #{tpu_custom_call.1} parent=5 // pred_check_branch
        %925 = sbr.rel (%p923) target = $region44
      $region43: #{tpu_custom_call.1} parent=5 // pred_region
        %s926 = ssub.s32 %s15, 2
        // Predicated region
        $region45: #{tpu_custom_call.1} parent=43 // pred_check
          %p927 = pneg %p112
        $region46: #{tpu_custom_call.1} parent=43 // pred_check_branch
          %929 = sbr.rel (%p927) target = $region48
        $region47: #{tpu_custom_call.1} parent=43 // pred_region
          %s930 = sand.u32 %s97, 1
          %s931 = scalar_lea.sflag [#allocation4], %s930
          %s932 = sand.u32 %s97, 1
          %s933 = smul.addr %s932, 96
          %s934 = scalar_lea.vmem [#allocation5], %s933
          %935 = dma.done %s931, 1536
        $region48: #{tpu_custom_call.1} parent=43 // pred_fallthru
          _
      $region44: #{tpu_custom_call.1} parent=5 // pred_fallthru
        _
    $region6: #{tpu_custom_call.1} parent=1 // loop_footer
      %s19 = sadd.s32 1, %s15
    $region7: #{tpu_custom_call.1} parent=1 // loop_footer_branch
      %14 = sbr.rel target = $region3
    $region8: #{tpu_custom_call.1} parent=1 // loop_exit
      _
    %936 = vsyncpa [#allocation3], 1
    %s937 = scalar_lea.sflag [#allocation3], 1
    %938 = vsyncpa %s937, 1
    %939 = vsyncpa [#allocation4], 1
    %s940 = scalar_lea.sflag [#allocation4], 1
    %941 = vsyncpa %s940, 1

</llo_original>
